<compile_context>
chip_gen: v7x
topology: tpu7x:2x2x1
jax: 0.10.0
libtpu: 0.0.40
codegen_flags: <defaults>
</compile_context>

<pallas_src>
import functools

import jax
import jax.numpy as jnp
from jax.experimental import pallas as pl
from jax.experimental.pallas import tpu as pltpu


def _round_up(x, m):
    return ((x + m - 1) // m) * m


def _fused_mlp_kernel(x_ref, w_ref, b_ref, o_ref, *, offsets, ksizes):
    """One batch tile of the whole MLP, entirely out of VMEM/vregs.

    x_ref: (TB, Din)        compute dtype (bf16 by default)
    w_ref: (K_total, N_pad) compute dtype  -- ragged per-layer stack along K
    b_ref: (L, 1, N_pad)    f32
    o_ref: (TB, N_pad)      f32
    """
    num_layers = len(offsets)
    cdt = w_ref.dtype
    h = x_ref[...]                       # (TB, Din)
    for i in range(num_layers):          # static unroll (tiny L)
        off, k = offsets[i], ksizes[i]   # static Python ints
        lhs = h[:, :k]                   # layer 0: full width; else padded-K slice
        # MXU: bf16 (or f32) operands, f32 accumulation.
        y = jnp.dot(lhs.astype(cdt), w_ref[pl.ds(off, k), :],
                    preferred_element_type=jnp.float32)
        # VPU: bias + ReLU in f32 (v5e has no bf16 VPU path).
        y = y + b_ref[i]                 # (1, N_pad) broadcasts over batch
        if i < num_layers - 1:
            y = jnp.maximum(y, 0.0)
        h = y
    o_ref[...] = h.astype(o_ref.dtype)


def pack_params(params, input_size, param_dtype=jnp.bfloat16):
    """Ragged pack: stack layer weights along K (fan-in padded to 16 for bf16
    sublane tiling), pad fan-out to a common lane-dense N_pad (multiple of 128).
    Zero padding is exact: padded weight rows/cols and bias lanes are zero, so
    padded output columns stay ReLU(0)=0 and are sliced off in the wrapper."""
    L = len(params)
    fins = [w.shape[0] for (w, _) in params]
    fouts = [w.shape[1] for (w, _) in params]
    assert fins[0] == input_size
    n_pad = _round_up(max(fouts), 128)
    fin_pads = [_round_up(f, 16) for f in fins]
    k_total = sum(fin_pads)

    w_stack = jnp.zeros((k_total, n_pad), param_dtype)
    b_stack = jnp.zeros((L, 1, n_pad), jnp.float32)
    offsets = []
    off = 0
    for i, (w, b) in enumerate(params):
        fin, fout = w.shape
        w_stack = w_stack.at[off:off + fin, :fout].set(w.astype(param_dtype))
        b_stack = b_stack.at[i, 0, :fout].set(b.astype(jnp.float32))
        offsets.append(off)
        off += fin_pads[i]

    # Contraction size per layer: layer 0 uses the real input width (x is not
    # feature-padded); later layers use the sublane-padded width (the extra
    # activation columns / weight rows are exact zeros).
    ksizes = [fins[0]] + [fin_pads[i] for i in range(1, L)]
    meta = dict(offsets=tuple(offsets), ksizes=tuple(ksizes),
                n_pad=n_pad, d_out=fouts[-1])
    return w_stack, b_stack, meta


@functools.partial(jax.jit,
                   static_argnames=("offsets", "ksizes", "n_pad", "d_out"))
def _fused_forward(x, w_stack, b_stack, *, offsets, ksizes, n_pad, d_out):
    B, din = x.shape
    cdt = w_stack.dtype

    # Batch tiling: multiple of 8 sublanes, capped at 512 rows per grid step so
    # VMEM per step stays small on every generation (v5e 16 MiB / v7x 32 MiB
    # scoped defaults) while keeping the MXU LHS reasonably full.
    tb = min(_round_up(B, 8), 512)
    bp = _round_up(B, tb)
    grid_b = bp // tb

    x_c = x.astype(cdt)                  # halve input bytes (bf16 path)
    if bp != B:
        x_c = jnp.zeros((bp, din), cdt).at[:B].set(x_c)

    kernel = functools.partial(_fused_mlp_kernel, offsets=offsets, ksizes=ksizes)
    out_p = pl.pallas_call(
        kernel,
        out_shape=jax.ShapeDtypeStruct((bp, n_pad), jnp.float32),
        grid=(grid_b,),
        in_specs=[
            # Activations stream per batch tile (last dim == full array dim).
            pl.BlockSpec((tb, din), lambda i: (i, 0)),
            # Weights/biases: constant index_map -> VMEM-resident across steps.
            pl.BlockSpec(w_stack.shape, lambda i: (0, 0)),
            pl.BlockSpec(b_stack.shape, lambda i: (0, 0, 0)),
        ],
        out_specs=pl.BlockSpec((tb, n_pad), lambda i: (i, 0)),
        compiler_params=pltpu.CompilerParams(
            dimension_semantics=("parallel",)),   # 2x TensorCores on v7x
    )(x_c, w_stack, b_stack)

    return out_p[:B, :d_out]


def init_params(key, input_size, layer_sizes):
    """Deterministic params mirroring nn.Linear shapes (stored transposed)."""
    sizes = [input_size] + list(layer_sizes) + [4]
    params = []
    for i in range(len(sizes) - 1):
        fan_in, fan_out = sizes[i], sizes[i + 1]
        key, kw, kb = jax.random.split(key, 3)
        bound = 1.0 / (fan_in ** 0.5)  # matches PyTorch Linear default init range
        w = jax.random.uniform(kw, (fan_in, fan_out), jnp.float32, -bound, bound)
        b = jax.random.uniform(kb, (fan_out,), jnp.float32, -bound, bound)
        params.append((w, b))
    return params


def my_neural_network_forward(x, packed):
    """Forward pass: (Linear + ReLU) for all but the last layer, Linear last."""
    w_stack, b_stack, meta = packed
    return _fused_forward(x, w_stack, b_stack,
                          offsets=meta["offsets"], ksizes=meta["ksizes"],
                          n_pad=meta["n_pad"], d_out=meta["d_out"])


if __name__ == "__main__":
    key = jax.random.PRNGKey(0)
    kx, kp = jax.random.split(key)

    batch = 8
    input_size = 32
    layer_sizes = [64, 32]

    x = jax.random.normal(kx, (batch, input_size), dtype=jnp.float32)
    params = init_params(kp, input_size, layer_sizes)
    packed = pack_params(params, input_size)  # one-time ragged pack + bf16 cast

    out = my_neural_network_forward(x, packed)
    jax.block_until_ready(out)
    assert out.shape == (batch, 4)

    # Pure-JAX f32 reference (bf16 MXU path => loose tolerance).
    ref = x
    for idx, (w, b) in enumerate(params):
        ref = ref @ w + b
        if idx < len(params) - 1:
            ref = jnp.maximum(ref, 0.0)
    assert jnp.allclose(out, ref, atol=1e-1, rtol=1e-1)

    print("KERNEL_OK")
</pallas_src>

<mosaic_0001>
module attributes {stable_mosaic.version = 11 : i64} {
  func.func @_fused_mlp_kernel(%arg0: i32, %arg1: memref<8x32xbf16, #tpu.memory_space<vmem>>, %arg2: memref<128x128xbf16, #tpu.memory_space<vmem>>, %arg3: memref<3x1x128xf32, #tpu.memory_space<vmem>>, %arg4: memref<8x128xf32, #tpu.memory_space<vmem>>) attributes {dimension_semantics = [#tpu.dimension_semantics<parallel>], iteration_bounds = array<i64: 1>, scalar_prefetch = 0 : i64, scratch_operands = 0 : i64, tpu.core_type = #tpu.core_type<tc>, window_params = [{transform_indices = @transform_0, window_bounds = array<i64: 8, 32>}, {pipeline_mode = #tpu.pipeline_mode<synchronous>, transform_indices = @transform_1, window_bounds = array<i64: 128, 128>}, {pipeline_mode = #tpu.pipeline_mode<synchronous>, transform_indices = @transform_2, window_bounds = array<i64: 3, 1, 128>}, {transform_indices = @transform_3, window_bounds = array<i64: 8, 128>}]} {
    %c0 = arith.constant 0 : index
    %c0_0 = arith.constant 0 : index
    %0 = vector.load %arg1[%c0, %c0_0] : memref<8x32xbf16, #tpu.memory_space<vmem>>, vector<8x32xbf16>
    %c0_1 = arith.constant 0 : index
    %c0_2 = arith.constant 0 : index
    %1 = vector.load %arg2[%c0_1, %c0_2] : memref<128x128xbf16, #tpu.memory_space<vmem>>, vector<32x128xbf16>
    %cst = arith.constant dense<0.000000e+00> : vector<8x128xf32>
    %2 = tpu.matmul %0, %1, %cst {dimension_numbers = #tpu.dot_dimension_numbers<[1], [0], [0], [1], [0, 0, 1, 1], [], []>} : vector<8x32xbf16>, vector<32x128xbf16>, vector<8x128xf32> -> vector<8x128xf32>
    %c0_3 = arith.constant 0 : index
    %c0_4 = arith.constant 0 : index
    %c0_5 = arith.constant 0 : index
    %3 = vector.load %arg3[%c0_3, %c0_4, %c0_5] : memref<3x1x128xf32, #tpu.memory_space<vmem>>, vector<1x1x128xf32>
    %4 = vector.shape_cast %3 : vector<1x1x128xf32> to vector<1x128xf32>
    %5 = vector.broadcast %4 : vector<1x128xf32> to vector<8x128xf32>
    %6 = arith.addf %2, %5 : vector<8x128xf32>
    %cst_6 = arith.constant 0.000000e+00 : f32
    %7 = vector.broadcast %cst_6 : f32 to vector<8x128xf32>
    %8 = arith.maximumf %6, %7 : vector<8x128xf32>
    %9 = vector.extract_strided_slice %8 {offsets = [0, 0], sizes = [8, 64], strides = [1, 1]} : vector<8x128xf32> to vector<8x64xf32>
    %10 = arith.truncf %9 : vector<8x64xf32> to vector<8x64xbf16>
    %c32 = arith.constant 32 : index
    %c0_7 = arith.constant 0 : index
    %11 = vector.load %arg2[%c32, %c0_7] : memref<128x128xbf16, #tpu.memory_space<vmem>>, vector<64x128xbf16>
    %cst_8 = arith.constant dense<0.000000e+00> : vector<8x128xf32>
    %12 = tpu.matmul %10, %11, %cst_8 {dimension_numbers = #tpu.dot_dimension_numbers<[1], [0], [0], [1], [0, 0, 1, 1], [], []>} : vector<8x64xbf16>, vector<64x128xbf16>, vector<8x128xf32> -> vector<8x128xf32>
    %c1 = arith.constant 1 : index
    %c0_9 = arith.constant 0 : index
    %c0_10 = arith.constant 0 : index
    %13 = vector.load %arg3[%c1, %c0_9, %c0_10] : memref<3x1x128xf32, #tpu.memory_space<vmem>>, vector<1x1x128xf32>
    %14 = vector.shape_cast %13 : vector<1x1x128xf32> to vector<1x128xf32>
    %15 = vector.broadcast %14 : vector<1x128xf32> to vector<8x128xf32>
    %16 = arith.addf %12, %15 : vector<8x128xf32>
    %cst_11 = arith.constant 0.000000e+00 : f32
    %17 = vector.broadcast %cst_11 : f32 to vector<8x128xf32>
    %18 = arith.maximumf %16, %17 : vector<8x128xf32>
    %19 = vector.extract_strided_slice %18 {offsets = [0, 0], sizes = [8, 32], strides = [1, 1]} : vector<8x128xf32> to vector<8x32xf32>
    %20 = arith.truncf %19 : vector<8x32xf32> to vector<8x32xbf16>
    %c96 = arith.constant 96 : index
    %c0_12 = arith.constant 0 : index
    %21 = vector.load %arg2[%c96, %c0_12] : memref<128x128xbf16, #tpu.memory_space<vmem>>, vector<32x128xbf16>
    %cst_13 = arith.constant dense<0.000000e+00> : vector<8x128xf32>
    %22 = tpu.matmul %20, %21, %cst_13 {dimension_numbers = #tpu.dot_dimension_numbers<[1], [0], [0], [1], [0, 0, 1, 1], [], []>} : vector<8x32xbf16>, vector<32x128xbf16>, vector<8x128xf32> -> vector<8x128xf32>
    %c2 = arith.constant 2 : index
    %c0_14 = arith.constant 0 : index
    %c0_15 = arith.constant 0 : index
    %23 = vector.load %arg3[%c2, %c0_14, %c0_15] : memref<3x1x128xf32, #tpu.memory_space<vmem>>, vector<1x1x128xf32>
    %24 = vector.shape_cast %23 : vector<1x1x128xf32> to vector<1x128xf32>
    %25 = vector.broadcast %24 : vector<1x128xf32> to vector<8x128xf32>
    %26 = arith.addf %22, %25 : vector<8x128xf32>
    %c0_16 = arith.constant 0 : index
    %c0_17 = arith.constant 0 : index
    %27 = vector.load %arg4[%c0_16, %c0_17] : memref<8x128xf32, #tpu.memory_space<vmem>>, vector<8x128xf32>
    tpu.vector_store %arg4[%c0_16, %c0_17], %26 {strides = array<i32>} : memref<8x128xf32, #tpu.memory_space<vmem>>, vector<8x128xf32>,
    return
  }
  func.func @transform_0(%arg0: i32) -> (i32, i32) {
    %c0_i32 = arith.constant 0 : i32
    %c0_i32_0 = arith.constant 0 : i32
    return %arg0, %c0_i32 : i32, i32
  }
  func.func @transform_1(%arg0: i32) -> (i32, i32) {
    %c0_i32 = arith.constant 0 : i32
    %c0_i32_0 = arith.constant 0 : i32
    %c0_i32_1 = arith.constant 0 : i32
    return %c0_i32, %c0_i32_0 : i32, i32
  }
  func.func @transform_2(%arg0: i32) -> (i32, i32, i32) {
    %c0_i32 = arith.constant 0 : i32
    %c0_i32_0 = arith.constant 0 : i32
    %c0_i32_1 = arith.constant 0 : i32
    %c0_i32_2 = arith.constant 0 : i32
    return %c0_i32, %c0_i32_0, %c0_i32_1 : i32, i32, i32
  }
  func.func @transform_3(%arg0: i32) -> (i32, i32) {
    %c0_i32 = arith.constant 0 : i32
    %c0_i32_0 = arith.constant 0 : i32
    return %arg0, %c0_i32 : i32, i32
  }
}

</mosaic_0001>

<llo_original>
// kernel: _fused_forward.1
$region0: #{_fused_forward.1}
  #allocation0 [shape = 'u32[]', space=smem, size = 0x4, offset = 0x4, fixed_abs, tag = 'smem constant byte address 0x4 - core index']
  #allocation1 [shape = 'u32[144,128]{1,0:T(1,128)}', space=vmem, size = 0x12000, scoped, tag = 'internal scratch']
  %s0 = inlined_call_operand.vmem [shape: bf16[8,32], index: 0, kind: input, shape index: {}]
  %s1 = inlined_call_operand.hbm [shape: bf16[128,128], index: 1, kind: input, shape index: {}]
  %s2 = inlined_call_operand.vmem [shape: f32[3,1,128], index: 2, kind: input, shape index: {}]
  %s3 = inlined_call_operand.vmem [shape: f32[8,128], index: 3, kind: output, shape index: {}]
  %s4 = sld [smem:[#allocation0]]
  $region26: #{_fused_forward.1} parent=0
    _
  %s6 = ssub.s32 1, %s4
  %s7 = scalar_select 0, %s6, %s4
  $region1: #{_fused_forward.1} parent=0
    #allocation2 [shape = 'u8[32768]{0}', space=vmem, size = 0x8000, scoped, tag = 'input window, operand 1, single buffered']
    #allocation3 [shape = 's32[1]{0}', space=sflag, size = 0x4, scoped, tag = 'scoped memory for _fused_forward.1']
    %8 = vsyncpa [#allocation3], 0
    // Predicated region
    $region2: #{_fused_forward.1} parent=1 // pred_check
      _
    $region3: #{_fused_forward.1} parent=1 // pred_check_branch
      %10 = sbr.rel (0) target = $region5
    $region4: #{_fused_forward.1} parent=1 // pred_region
      _
    $region5: #{_fused_forward.1} parent=1 // pred_fallthru
      _
    // Predicated region
    $region6: #{_fused_forward.1} parent=1 // pred_check
      _
    $region7: #{_fused_forward.1} parent=1 // pred_check_branch
      %12 = sbr.rel (0) target = $region9
    $region8: #{_fused_forward.1} parent=1 // pred_region
      %s14 = ssub.s32 1024, 1024
      %15 = vsyncadd [#allocation3], %s14
      %s16 = sshll.u32 [#allocation2], 4
      %s17 = int_to_ptr.vmem [resolvable:$true] %s16
      %22 = dma.hbm_to_vmem [thread:$0]  %s1, 1024, %s17, [#allocation3], 64, 64, 4
    $region9: #{_fused_forward.1} parent=1 // pred_fallthru
      _
    // Predicated region
    $region10: #{_fused_forward.1} parent=1 // pred_check
      _
    $region11: #{_fused_forward.1} parent=1 // pred_check_branch
      %24 = sbr.rel (0) target = $region13
    $region12: #{_fused_forward.1} parent=1 // pred_region
      _
    $region13: #{_fused_forward.1} parent=1 // pred_fallthru
      _
    // Predicated region
    $region14: #{_fused_forward.1} parent=1 // pred_check
      _
    $region15: #{_fused_forward.1} parent=1 // pred_check_branch
      %26 = sbr.rel (0) target = $region17
    $region16: #{_fused_forward.1} parent=1 // pred_region
      %27 = dma.done [#allocation3], 1024
    $region17: #{_fused_forward.1} parent=1 // pred_fallthru
      _
    %v29 = vld [vmem:[%s0] sm:$0xf]
    %v30 = vld [vmem:[#allocation2] sm:$0xf]
    %v31 = vld [vmem:[#allocation2 + $0x4] sm:$0xf]
    %v32 = vld [vmem:[#allocation2 + $0x8] sm:$0xf]
    %v33 = vld [vmem:[#allocation2 + $0xc] sm:$0xf]
    %v34 = vld [vmem:[%s2] sm:$0x1]
    %v36 = vlaneseq
    %v37 = vshrl.u32 %v36, 7
    %v38 = vsub.s32 0, %v37
    %v39 = vrot.slane %v34, %v38
    %v45 = vunpack.c.l.b16 %v30
    %v46 = vunpack.c.l.b16 %v31
    %v47 = vunpack.c.l.b16 %v32
    %v48 = vunpack.c.l.b16 %v33
    %v49 = vpack.c.b16 %v46, %v45
    %v50 = vpack.c.b16 %v48, %v47
    %vm53 = vcmask 261120
    %v55 = vsel %vm53, %v29, 0
    %57 = vmatprep.subr.bf16.mxu0 0
    %58 = vmatpush1.bf16.msra.mxu0 %v49
    %59 = vmatprep.subr.bf16.mxu0 0
    %60 = vmatpush1.bf16.msra.mxu0 %v50
    %61 = vmatprep.subr.bf16.mxu0 0
    %62 = vmatpush1.bf16.msra.mxu0 0
    %63 = vmatprep.subr.bf16.mxu0 0
    %64 = vmatpush1.bf16.msra.mxu0 0
    %65 = vmatprep.subr.bf16.mxu0 0
    %66 = vmatpush1.bf16.msra.mxu0 0
    %67 = vmatprep.subr.bf16.mxu0 0
    %68 = vmatpush1.bf16.msra.mxu0 0
    %69 = vmatprep.subr.bf16.mxu0 0
    %70 = vmatpush1.bf16.msra.mxu0 0
    %71 = vmatprep.subr.bf16.mxu0 0
    %72 = vmatpush1.bf16.msra.mxu0 0
    %73 = vmatprep.subr.bf16.mxu0 0
    %74 = vmatpush1.bf16.msra.mxu0 0
    %75 = vmatprep.subr.bf16.mxu0 0
    %76 = vmatpush1.bf16.msra.mxu0 0
    %77 = vmatprep.subr.bf16.mxu0 0
    %78 = vmatpush1.bf16.msra.mxu0 0
    %79 = vmatprep.subr.bf16.mxu0 0
    %80 = vmatpush1.bf16.msra.mxu0 0
    %81 = vmatprep.subr.bf16.mxu0 0
    %82 = vmatpush1.bf16.msra.mxu0 0
    %83 = vmatprep.subr.bf16.mxu0 0
    %84 = vmatpush1.bf16.msra.mxu0 0
    %85 = vmatprep.subr.bf16.mxu0 0
    %86 = vmatpush1.bf16.msra.mxu0 0
    %87 = vmatprep.subr.bf16.mxu0 0
    %88 = vmatpush1.bf16.msra.mxu0 0
    %89 = vmatprep.mubr.bf16.mxu0 0
    %90 = vmatmul.mubr.bf16.gmra.mrb[0].mxu0 %v55
    %v91 = vpop.f32.mrb[0].mxu0
    %v92 = vadd.f32 %v39, %v91
    %v93 = vpop.f32.mrb[0].mxu0
    %v94 = vpop.f32.mrb[0].mxu0
    %v95 = vpop.f32.mrb[0].mxu0
    %96 = vdwg.mxu0
    %v97 = vmax.f32 %v92, 0.0
    %v98 = vpack.c.bf16 %v97, %v97
    %v99 = vld [vmem:[#allocation2 + $0x10] sm:$0xf]
    %v100 = vld [vmem:[#allocation2 + $0x14] sm:$0xf]
    %v101 = vld [vmem:[#allocation2 + $0x18] sm:$0xf]
    %v102 = vld [vmem:[#allocation2 + $0x1c] sm:$0xf]
    %v103 = vld [vmem:[#allocation2 + $0x20] sm:$0xf]
    %v104 = vld [vmem:[#allocation2 + $0x24] sm:$0xf]
    %v105 = vld [vmem:[#allocation2 + $0x28] sm:$0xf]
    %v106 = vld [vmem:[#allocation2 + $0x2c] sm:$0xf]
    %s107 = scalar_lea.vmem %s2, 1
    %v108 = vld [vmem:[%s107] sm:$0x1]
    %v110 = vlaneseq
    %v111 = vshrl.u32 %v110, 7
    %v112 = vsub.s32 0, %v111
    %v113 = vrot.slane %v108, %v112
    %v123 = vunpack.c.l.b16 %v99
    %v124 = vunpack.c.l.b16 %v100
    %v125 = vunpack.c.l.b16 %v101
    %v126 = vunpack.c.l.b16 %v102
    %v127 = vunpack.c.l.b16 %v103
    %v128 = vunpack.c.l.b16 %v104
    %v129 = vunpack.c.l.b16 %v105
    %v130 = vunpack.c.l.b16 %v106
    %v131 = vpack.c.b16 %v124, %v123
    %v132 = vpack.c.b16 %v126, %v125
    %v133 = vpack.c.b16 %v128, %v127
    %v134 = vpack.c.b16 %v130, %v129
    %vm139 = vcmask 523264
    %v141 = vsel %vm139, %v98, 0
    %143 = vmatprep.subr.bf16.mxu0 0
    %144 = vmatpush1.bf16.msra.mxu0 %v131
    %145 = vmatprep.subr.bf16.mxu0 0
    %146 = vmatpush1.bf16.msra.mxu0 %v132
    %147 = vmatprep.subr.bf16.mxu0 0
    %148 = vmatpush1.bf16.msra.mxu0 %v133
    %149 = vmatprep.subr.bf16.mxu0 0
    %150 = vmatpush1.bf16.msra.mxu0 %v134
    %151 = vmatprep.subr.bf16.mxu0 0
    %152 = vmatpush1.bf16.msra.mxu0 0
    %153 = vmatprep.subr.bf16.mxu0 0
    %154 = vmatpush1.bf16.msra.mxu0 0
    %155 = vmatprep.subr.bf16.mxu0 0
    %156 = vmatpush1.bf16.msra.mxu0 0
    %157 = vmatprep.subr.bf16.mxu0 0
    %158 = vmatpush1.bf16.msra.mxu0 0
    %159 = vmatprep.subr.bf16.mxu0 0
    %160 = vmatpush1.bf16.msra.mxu0 0
    %161 = vmatprep.subr.bf16.mxu0 0
    %162 = vmatpush1.bf16.msra.mxu0 0
    %163 = vmatprep.subr.bf16.mxu0 0
    %164 = vmatpush1.bf16.msra.mxu0 0
    %165 = vmatprep.subr.bf16.mxu0 0
    %166 = vmatpush1.bf16.msra.mxu0 0
    %167 = vmatprep.subr.bf16.mxu0 0
    %168 = vmatpush1.bf16.msra.mxu0 0
    %169 = vmatprep.subr.bf16.mxu0 0
    %170 = vmatpush1.bf16.msra.mxu0 0
    %171 = vmatprep.subr.bf16.mxu0 0
    %172 = vmatpush1.bf16.msra.mxu0 0
    %173 = vmatprep.subr.bf16.mxu0 0
    %174 = vmatpush1.bf16.msra.mxu0 0
    %175 = vmatprep.mubr.bf16.mxu0 0
    %176 = vmatmul.mubr.bf16.gmra.mrb[0].mxu0 %v141
    %v177 = vpop.f32.mrb[0].mxu0
    %v178 = vadd.f32 %v113, %v177
    %v179 = vpop.f32.mrb[0].mxu0
    %v180 = vpop.f32.mrb[0].mxu0
    %v181 = vpop.f32.mrb[0].mxu0
    %182 = vdwg.mxu0
    %v183 = vmax.f32 %v178, 0.0
    %v184 = vpack.c.bf16 %v183, %v183
    %v185 = vld [vmem:[#allocation2 + $0x30] sm:$0xf]
    %v186 = vld [vmem:[#allocation2 + $0x34] sm:$0xf]
    %v187 = vld [vmem:[#allocation2 + $0x38] sm:$0xf]
    %v188 = vld [vmem:[#allocation2 + $0x3c] sm:$0xf]
    %s189 = scalar_lea.vmem %s2, 2
    %v190 = vld [vmem:[%s189] sm:$0x1]
    %v192 = vlaneseq
    %v193 = vshrl.u32 %v192, 7
    %v194 = vsub.s32 0, %v193
    %v195 = vrot.slane %v190, %v194
    %v201 = vunpack.c.l.b16 %v185
    %v202 = vunpack.c.l.b16 %v186
    %v203 = vunpack.c.l.b16 %v187
    %v204 = vunpack.c.l.b16 %v188
    %v205 = vpack.c.b16 %v202, %v201
    %v206 = vpack.c.b16 %v204, %v203
    %v210 = vsel %vm53, %v184, 0
    %212 = vmatprep.subr.bf16.mxu0 0
    %213 = vmatpush1.bf16.msra.mxu0 %v205
    %214 = vmatprep.subr.bf16.mxu0 0
    %215 = vmatpush1.bf16.msra.mxu0 %v206
    %216 = vmatprep.subr.bf16.mxu0 0
    %217 = vmatpush1.bf16.msra.mxu0 0
    %218 = vmatprep.subr.bf16.mxu0 0
    %219 = vmatpush1.bf16.msra.mxu0 0
    %220 = vmatprep.subr.bf16.mxu0 0
    %221 = vmatpush1.bf16.msra.mxu0 0
    %222 = vmatprep.subr.bf16.mxu0 0
    %223 = vmatpush1.bf16.msra.mxu0 0
    %224 = vmatprep.subr.bf16.mxu0 0
    %225 = vmatpush1.bf16.msra.mxu0 0
    %226 = vmatprep.subr.bf16.mxu0 0
    %227 = vmatpush1.bf16.msra.mxu0 0
    %228 = vmatprep.subr.bf16.mxu0 0
    %229 = vmatpush1.bf16.msra.mxu0 0
    %230 = vmatprep.subr.bf16.mxu0 0
    %231 = vmatpush1.bf16.msra.mxu0 0
    %232 = vmatprep.subr.bf16.mxu0 0
    %233 = vmatpush1.bf16.msra.mxu0 0
    %234 = vmatprep.subr.bf16.mxu0 0
    %235 = vmatpush1.bf16.msra.mxu0 0
    %236 = vmatprep.subr.bf16.mxu0 0
    %237 = vmatpush1.bf16.msra.mxu0 0
    %238 = vmatprep.subr.bf16.mxu0 0
    %239 = vmatpush1.bf16.msra.mxu0 0
    %240 = vmatprep.subr.bf16.mxu0 0
    %241 = vmatpush1.bf16.msra.mxu0 0
    %242 = vmatprep.subr.bf16.mxu0 0
    %243 = vmatpush1.bf16.msra.mxu0 0
    %244 = vmatprep.mubr.bf16.mxu0 0
    %245 = vmatmul.mubr.bf16.gmra.mrb[0].mxu0 %v210
    %v246 = vpop.f32.mrb[0].mxu0
    %v247 = vadd.f32 %v195, %v246
    %v248 = vpop.f32.mrb[0].mxu0
    %v249 = vpop.f32.mrb[0].mxu0
    %v250 = vpop.f32.mrb[0].mxu0
    %251 = vdwg.mxu0
    %252 = vst [vmem:[%s3] sm:$0xff] %v247
    // Predicated region
    $region18: #{_fused_forward.1} parent=1 // pred_check
      _
    $region19: #{_fused_forward.1} parent=1 // pred_check_branch
      %254 = sbr.rel (0) target = $region21
    $region20: #{_fused_forward.1} parent=1 // pred_region
      _
    $region21: #{_fused_forward.1} parent=1 // pred_fallthru
      _
    // Predicated region
    $region22: #{_fused_forward.1} parent=1 // pred_check
      _
    $region23: #{_fused_forward.1} parent=1 // pred_check_branch
      %256 = sbr.rel (0) target = $region25
    $region24: #{_fused_forward.1} parent=1 // pred_region
      _
    $region25: #{_fused_forward.1} parent=1 // pred_fallthru
      _
    %257 = vsyncpa [#allocation3], 1

</llo_original>
